<compile_context>
chip_gen: v7x
topology: tpu7x:2x2x1
jax: 0.10.0
libtpu: 0.0.40
codegen_flags: <defaults>
</compile_context>

<pallas_src>
import jax
import jax.numpy as jnp
from jax.experimental import pallas as pl
from jax.experimental.pallas import tpu as pltpu


def _round_up(x: int, m: int) -> int:
    return ((x + m - 1) // m) * m


def _make_ffn_kernel(d_model_true: int, eps: float = 1e-5):
    inv_d = 1.0 / float(d_model_true)

    def kernel(x_ref, w1_ref, b1_ref, w2_ref, b2_ref, g_ref, beta_ref, o_ref):
        # x tile, kept in f32 for the residual / LayerNorm math.
        x = x_ref[...].astype(jnp.float32)

        # linear1 + ReLU : bf16 MXU operands, f32 accumulation.
        h = jnp.dot(x.astype(jnp.bfloat16), w1_ref[...],
                    preferred_element_type=jnp.float32) + b1_ref[...]
        h = jnp.maximum(h, 0.0)

        # linear2 : bf16 MXU operands, f32 accumulation.
        y = jnp.dot(h.astype(jnp.bfloat16), w2_ref[...],
                    preferred_element_type=jnp.float32) + b2_ref[...]

        # Residual.  Padded lanes of both x and y are zero by construction.
        r = x + y

        # LayerNorm over the true d_model lanes (biased variance, eps, affine).
        mean = jnp.sum(r, axis=-1, keepdims=True) * inv_d
        lane = jax.lax.broadcasted_iota(jnp.int32, r.shape, 1)
        cent = jnp.where(lane < d_model_true, r - mean, 0.0)
        var = jnp.sum(cent * cent, axis=-1, keepdims=True) * inv_d
        normed = cent * jax.lax.rsqrt(var + eps)
        o_ref[...] = (normed * g_ref[...] + beta_ref[...]).astype(o_ref.dtype)

    return kernel


def ffn_layer(tgt, w1, b1, w2, b2, gamma, beta, *, tile_rows=128, eps=1e-5,
              vmem_limit_bytes=None):
    """Fused FFNLayer.forward_post.  tgt: (seq, batch, d_model)."""
    seq, bsz, d_model = tgt.shape
    dff = w1.shape[1]
    out_dtype = tgt.dtype

    # Lane-pad feature dims to multiples of 128 (dense vst / full MXU lanes).
    d_pad = _round_up(d_model, 128)
    f_pad = _round_up(dff, 128)

    n = seq * bsz
    # Avoid over-padding tiny inputs; rows need only sublane (8) alignment.
    tile_rows = max(8, min(tile_rows, _round_up(n, 8)))
    n_pad = _round_up(n, tile_rows)
    grid = (n_pad // tile_rows,)

    x2d = jnp.pad(tgt.reshape(n, d_model).astype(jnp.float32),
                  ((0, n_pad - n), (0, d_pad - d_model)))

    # bf16 weights: halves resident VMEM (v7x budget) and feeds the bf16 MXU.
    w1p = jnp.pad(w1, ((0, d_pad - d_model), (0, f_pad - dff))).astype(jnp.bfloat16)
    w2p = jnp.pad(w2, ((0, f_pad - dff), (0, d_pad - d_model))).astype(jnp.bfloat16)
    b1p = jnp.pad(b1.astype(jnp.float32), (0, f_pad - dff)).reshape(1, f_pad)
    b2p = jnp.pad(b2.astype(jnp.float32), (0, d_pad - d_model)).reshape(1, d_pad)
    g2d = jnp.pad(gamma.astype(jnp.float32), (0, d_pad - d_model)).reshape(1, d_pad)
    be2d = jnp.pad(beta.astype(jnp.float32), (0, d_pad - d_model)).reshape(1, d_pad)

    # VMEM budget: in/out tiles double-buffered, weights single-buffered,
    # plus the (tile_rows, f_pad) hidden activation (with headroom).
    if vmem_limit_bytes is None:
        io_bytes = 2 * 2 * tile_rows * d_pad * 4
        w_bytes = 2 * d_pad * f_pad * 2 + (f_pad + 3 * d_pad) * 4
        h_bytes = tile_rows * f_pad * 4
        est = io_bytes + w_bytes + 2 * h_bytes
        vmem_limit_bytes = int(min(max(2 * est, 32 * 1024 * 1024),
                                   64 * 1024 * 1024))

    def const_spec(shape):
        # Grid-invariant operands: constant index_map, single-buffered.
        return pl.BlockSpec(shape, lambda i: (0, 0),
                            pipeline_mode=pl.Buffered(1))

    out = pl.pallas_call(
        _make_ffn_kernel(d_model, eps),
        out_shape=jax.ShapeDtypeStruct((n_pad, d_pad), out_dtype),
        grid_spec=pltpu.PrefetchScalarGridSpec(
            num_scalar_prefetch=0,
            grid=grid,
            in_specs=[
                pl.BlockSpec((tile_rows, d_pad), lambda i: (i, 0)),  # x tile
                const_spec((d_pad, f_pad)),                          # W1
                const_spec((1, f_pad)),                              # b1
                const_spec((f_pad, d_pad)),                          # W2
                const_spec((1, d_pad)),                              # b2
                const_spec((1, d_pad)),                              # gamma
                const_spec((1, d_pad)),                              # beta
            ],
            out_specs=pl.BlockSpec((tile_rows, d_pad), lambda i: (i, 0)),
        ),
        compiler_params=pltpu.CompilerParams(
            dimension_semantics=("parallel",),
            vmem_limit_bytes=vmem_limit_bytes),
    )(x2d, w1p, b1p, w2p, b2p, g2d, be2d)

    return out[:n, :d_model].reshape(seq, bsz, d_model)


def _xavier_uniform(key, fan_in, fan_out, dtype=jnp.float32):
    # matches torch.nn.init.xavier_uniform_ with gain=1
    limit = (6.0 / (fan_in + fan_out)) ** 0.5
    return jax.random.uniform(key, (fan_in, fan_out), dtype, -limit, limit)


if __name__ == "__main__":
    # Small but representative shapes: 100 decoder queries (Mask2Former style),
    # batch=2, d_model=128, dim_feedforward=256.  n = 200 exercises row padding.
    seq, batch, d_model, dff = 100, 2, 128, 256

    key = jax.random.PRNGKey(0)
    k_x, k_w1, k_b1, k_w2, k_b2 = jax.random.split(key, 5)

    tgt = jax.random.normal(k_x, (seq, batch, d_model), jnp.float32)

    # linear1: Linear(d_model, dff); linear2: Linear(dff, d_model)
    # weights stored as (in, out) = W_torch.T
    w1 = _xavier_uniform(k_w1, d_model, dff)
    b1 = 0.02 * jax.random.normal(k_b1, (dff,), jnp.float32)
    w2 = _xavier_uniform(k_w2, dff, d_model)
    b2 = 0.02 * jax.random.normal(k_b2, (d_model,), jnp.float32)
    gamma = jnp.ones((d_model,), jnp.float32)   # LayerNorm weight
    beta = jnp.zeros((d_model,), jnp.float32)   # LayerNorm bias

    out = ffn_layer(tgt, w1, b1, w2, b2, gamma, beta, tile_rows=128)
    jax.block_until_ready(out)

    # Reference 1: same bf16-operand / f32-accumulate matmuls (tight check).
    x2d = tgt.reshape(-1, d_model)
    h = jnp.maximum(
        jnp.dot(x2d.astype(jnp.bfloat16), w1.astype(jnp.bfloat16),
                preferred_element_type=jnp.float32) + b1, 0.0)
    y = jnp.dot(h.astype(jnp.bfloat16), w2.astype(jnp.bfloat16),
                preferred_element_type=jnp.float32) + b2
    r = x2d + y
    mean = jnp.mean(r, axis=-1, keepdims=True)
    var = jnp.mean((r - mean) ** 2, axis=-1, keepdims=True)
    ref = ((r - mean) * jax.lax.rsqrt(var + 1e-5) * gamma + beta).reshape(
        seq, batch, d_model)
    assert jnp.allclose(out, ref, atol=1e-2, rtol=1e-2), \
        float(jnp.max(jnp.abs(out - ref)))

    # Reference 2: full f32 math (loose check on the bf16 MXU approximation).
    hf = jnp.maximum(x2d @ w1 + b1, 0.0)
    yf = hf @ w2 + b2
    rf = x2d + yf
    mf = jnp.mean(rf, axis=-1, keepdims=True)
    vf = jnp.mean((rf - mf) ** 2, axis=-1, keepdims=True)
    reff = ((rf - mf) * jax.lax.rsqrt(vf + 1e-5) * gamma + beta).reshape(
        seq, batch, d_model)
    assert jnp.allclose(out, reff, atol=5e-2, rtol=5e-2), \
        float(jnp.max(jnp.abs(out - reff)))

    print("KERNEL_OK")
</pallas_src>

<mosaic_0001>
module attributes {stable_mosaic.version = 11 : i64} {
  func.func @kernel(%arg0: i32, %arg1: memref<128x128xf32, #tpu.memory_space<vmem>>, %arg2: memref<128x256xbf16, #tpu.memory_space<vmem>>, %arg3: memref<1x256xf32, #tpu.memory_space<vmem>>, %arg4: memref<256x128xbf16, #tpu.memory_space<vmem>>, %arg5: memref<1x128xf32, #tpu.memory_space<vmem>>, %arg6: memref<1x128xf32, #tpu.memory_space<vmem>>, %arg7: memref<1x128xf32, #tpu.memory_space<vmem>>, %arg8: memref<128x128xf32, #tpu.memory_space<vmem>>) attributes {dimension_semantics = [#tpu.dimension_semantics<parallel>], iteration_bounds = array<i64: 2>, scalar_prefetch = 0 : i64, scratch_operands = 0 : i64, tpu.core_type = #tpu.core_type<tc>, window_params = [{transform_indices = @transform_0, window_bounds = array<i64: 128, 128>}, {pipeline_mode = #tpu.pipeline_mode<synchronous>, transform_indices = @transform_1, window_bounds = array<i64: 128, 256>}, {pipeline_mode = #tpu.pipeline_mode<synchronous>, transform_indices = @transform_2, window_bounds = array<i64: 1, 256>}, {pipeline_mode = #tpu.pipeline_mode<synchronous>, transform_indices = @transform_3, window_bounds = array<i64: 256, 128>}, {pipeline_mode = #tpu.pipeline_mode<synchronous>, transform_indices = @transform_4, window_bounds = array<i64: 1, 128>}, {pipeline_mode = #tpu.pipeline_mode<synchronous>, transform_indices = @transform_5, window_bounds = array<i64: 1, 128>}, {pipeline_mode = #tpu.pipeline_mode<synchronous>, transform_indices = @transform_6, window_bounds = array<i64: 1, 128>}, {transform_indices = @transform_7, window_bounds = array<i64: 128, 128>}]} {
    %c0 = arith.constant 0 : index
    %c0_0 = arith.constant 0 : index
    %0 = vector.load %arg1[%c0, %c0_0] : memref<128x128xf32, #tpu.memory_space<vmem>>, vector<128x128xf32>
    %1 = arith.truncf %0 : vector<128x128xf32> to vector<128x128xbf16>
    %c0_1 = arith.constant 0 : index
    %c0_2 = arith.constant 0 : index
    %2 = vector.load %arg2[%c0_1, %c0_2] : memref<128x256xbf16, #tpu.memory_space<vmem>>, vector<128x256xbf16>
    %cst = arith.constant dense<0.000000e+00> : vector<128x256xf32>
    %3 = tpu.matmul %1, %2, %cst {dimension_numbers = #tpu.dot_dimension_numbers<[1], [0], [0], [1], [0, 0, 1, 1], [], []>} : vector<128x128xbf16>, vector<128x256xbf16>, vector<128x256xf32> -> vector<128x256xf32>
    %c0_3 = arith.constant 0 : index
    %c0_4 = arith.constant 0 : index
    %4 = vector.load %arg3[%c0_3, %c0_4] : memref<1x256xf32, #tpu.memory_space<vmem>>, vector<1x256xf32>
    %5 = vector.broadcast %4 : vector<1x256xf32> to vector<128x256xf32>
    %6 = arith.addf %3, %5 : vector<128x256xf32>
    %cst_5 = arith.constant 0.000000e+00 : f32
    %7 = vector.broadcast %cst_5 : f32 to vector<128x256xf32>
    %8 = arith.maximumf %6, %7 : vector<128x256xf32>
    %9 = arith.truncf %8 : vector<128x256xf32> to vector<128x256xbf16>
    %c0_6 = arith.constant 0 : index
    %c0_7 = arith.constant 0 : index
    %10 = vector.load %arg4[%c0_6, %c0_7] : memref<256x128xbf16, #tpu.memory_space<vmem>>, vector<256x128xbf16>
    %cst_8 = arith.constant dense<0.000000e+00> : vector<128x128xf32>
    %11 = tpu.matmul %9, %10, %cst_8 {dimension_numbers = #tpu.dot_dimension_numbers<[1], [0], [0], [1], [0, 0, 1, 1], [], []>} : vector<128x256xbf16>, vector<256x128xbf16>, vector<128x128xf32> -> vector<128x128xf32>
    %c0_9 = arith.constant 0 : index
    %c0_10 = arith.constant 0 : index
    %12 = vector.load %arg5[%c0_9, %c0_10] : memref<1x128xf32, #tpu.memory_space<vmem>>, vector<1x128xf32>
    %13 = vector.broadcast %12 : vector<1x128xf32> to vector<128x128xf32>
    %14 = arith.addf %11, %13 : vector<128x128xf32>
    %15 = arith.addf %0, %14 : vector<128x128xf32>
    %cst_11 = arith.constant dense<0.000000e+00> : vector<128xf32>
    %16 = vector.multi_reduction <add>, %15, %cst_11 [1] : vector<128x128xf32> to vector<128xf32>
    %17 = vector.shape_cast %16 : vector<128xf32> to vector<128x1xf32>
    %cst_12 = arith.constant 7.812500e-03 : f32
    %18 = vector.broadcast %cst_12 : f32 to vector<128x1xf32>
    %19 = arith.mulf %17, %18 : vector<128x1xf32>
    %20 = tpu.iota {dimensions = array<i32: 1>} : vector<128x128xi32>
    %c128_i32 = arith.constant 128 : i32
    %21 = vector.broadcast %c128_i32 : i32 to vector<128x128xi32>
    %22 = arith.cmpi slt, %20, %21 : vector<128x128xi32>
    %23 = vector.broadcast %19 : vector<128x1xf32> to vector<128x128xf32>
    %24 = arith.subf %15, %23 : vector<128x128xf32>
    %cst_13 = arith.constant 0.000000e+00 : f32
    %25 = vector.broadcast %cst_13 : f32 to vector<128x128xf32>
    %26 = arith.select %22, %24, %25 : vector<128x128xi1>, vector<128x128xf32>
    %27 = arith.mulf %26, %26 : vector<128x128xf32>
    %cst_14 = arith.constant dense<0.000000e+00> : vector<128xf32>
    %28 = vector.multi_reduction <add>, %27, %cst_14 [1] : vector<128x128xf32> to vector<128xf32>
    %29 = vector.shape_cast %28 : vector<128xf32> to vector<128x1xf32>
    %cst_15 = arith.constant 7.812500e-03 : f32
    %30 = vector.broadcast %cst_15 : f32 to vector<128x1xf32>
    %31 = arith.mulf %29, %30 : vector<128x1xf32>
    %cst_16 = arith.constant 9.99999974E-6 : f32
    %32 = vector.broadcast %cst_16 : f32 to vector<128x1xf32>
    %33 = arith.addf %31, %32 : vector<128x1xf32>
    %34 = math.rsqrt %33 : vector<128x1xf32>
    %35 = vector.broadcast %34 : vector<128x1xf32> to vector<128x128xf32>
    %36 = arith.mulf %26, %35 : vector<128x128xf32>
    %c0_17 = arith.constant 0 : index
    %c0_18 = arith.constant 0 : index
    %37 = vector.load %arg6[%c0_17, %c0_18] : memref<1x128xf32, #tpu.memory_space<vmem>>, vector<1x128xf32>
    %38 = vector.broadcast %37 : vector<1x128xf32> to vector<128x128xf32>
    %39 = arith.mulf %36, %38 : vector<128x128xf32>
    %c0_19 = arith.constant 0 : index
    %c0_20 = arith.constant 0 : index
    %40 = vector.load %arg7[%c0_19, %c0_20] : memref<1x128xf32, #tpu.memory_space<vmem>>, vector<1x128xf32>
    %41 = vector.broadcast %40 : vector<1x128xf32> to vector<128x128xf32>
    %42 = arith.addf %39, %41 : vector<128x128xf32>
    %c0_21 = arith.constant 0 : index
    %c0_22 = arith.constant 0 : index
    %43 = vector.load %arg8[%c0_21, %c0_22] : memref<128x128xf32, #tpu.memory_space<vmem>>, vector<128x128xf32>
    tpu.vector_store %arg8[%c0_21, %c0_22], %42 {strides = array<i32>} : memref<128x128xf32, #tpu.memory_space<vmem>>, vector<128x128xf32>,
    return
  }
  func.func @transform_0(%arg0: i32) -> (i32, i32) {
    %c0_i32 = arith.constant 0 : i32
    %c0_i32_0 = arith.constant 0 : i32
    return %arg0, %c0_i32 : i32, i32
  }
  func.func @transform_1(%arg0: i32) -> (i32, i32) {
    %c0_i32 = arith.constant 0 : i32
    %c0_i32_0 = arith.constant 0 : i32
    %c0_i32_1 = arith.constant 0 : i32
    return %c0_i32, %c0_i32_0 : i32, i32
  }
  func.func @transform_2(%arg0: i32) -> (i32, i32) {
    %c0_i32 = arith.constant 0 : i32
    %c0_i32_0 = arith.constant 0 : i32
    %c0_i32_1 = arith.constant 0 : i32
    return %c0_i32, %c0_i32_0 : i32, i32
  }
  func.func @transform_3(%arg0: i32) -> (i32, i32) {
    %c0_i32 = arith.constant 0 : i32
    %c0_i32_0 = arith.constant 0 : i32
    %c0_i32_1 = arith.constant 0 : i32
    return %c0_i32, %c0_i32_0 : i32, i32
  }
  func.func @transform_4(%arg0: i32) -> (i32, i32) {
    %c0_i32 = arith.constant 0 : i32
    %c0_i32_0 = arith.constant 0 : i32
    %c0_i32_1 = arith.constant 0 : i32
    return %c0_i32, %c0_i32_0 : i32, i32
  }
  func.func @transform_5(%arg0: i32) -> (i32, i32) {
    %c0_i32 = arith.constant 0 : i32
    %c0_i32_0 = arith.constant 0 : i32
    %c0_i32_1 = arith.constant 0 : i32
    return %c0_i32, %c0_i32_0 : i32, i32
  }
  func.func @transform_6(%arg0: i32) -> (i32, i32) {
    %c0_i32 = arith.constant 0 : i32
    %c0_i32_0 = arith.constant 0 : i32
    %c0_i32_1 = arith.constant 0 : i32
    return %c0_i32, %c0_i32_0 : i32, i32
  }
  func.func @transform_7(%arg0: i32) -> (i32, i32) {
    %c0_i32 = arith.constant 0 : i32
    %c0_i32_0 = arith.constant 0 : i32
    return %arg0, %c0_i32 : i32, i32
  }
}

</mosaic_0001>

<llo_original>
// kernel: tpu_custom_call.1
$region0: #{tpu_custom_call.1}
  #allocation0 [shape = 'u32[]', space=smem, size = 0x4, offset = 0x4, fixed_abs, tag = 'smem constant byte address 0x4 - core index']
  #allocation1 [shape = 'u32[144,128]{1,0:T(1,128)}', space=vmem, size = 0x12000, scoped, tag = 'internal scratch']
  %s0 = inlined_call_operand.hbm [shape: f32[256,128], index: 0, kind: input, shape index: {}]
  %s1 = inlined_call_operand.hbm [shape: bf16[128,256], index: 1, kind: input, shape index: {}]
  %s2 = inlined_call_operand.vmem [shape: f32[1,256], index: 2, kind: input, shape index: {}]
  %s3 = inlined_call_operand.hbm [shape: bf16[256,128], index: 3, kind: input, shape index: {}]
  %s4 = inlined_call_operand.vmem [shape: f32[1,128], index: 4, kind: input, shape index: {}]
  %s5 = inlined_call_operand.vmem [shape: f32[1,128], index: 5, kind: input, shape index: {}]
  %s6 = inlined_call_operand.vmem [shape: f32[1,128], index: 6, kind: input, shape index: {}]
  %s7 = inlined_call_operand.hbm [shape: f32[256,128], index: 7, kind: output, shape index: {}]
  %s8 = sld [smem:[#allocation0]]
  $region73: #{tpu_custom_call.1} parent=0
    _
  %s10 = ssub.s32 1, %s8
  %s11 = scalar_select 0, %s10, %s8
  $region1: #{tpu_custom_call.1} parent=0
    #allocation2 [shape = 'u8[131072]{0}', space=vmem, size = 0x20000, scoped, tag = 'input window, operand 0']
    #allocation3 [shape = 's32[2]{0}', space=sflag, size = 0x8, scoped, tag = 'scoped memory for tpu_custom_call.1']
    #allocation4 [shape = 's32[2]{0}', space=sflag, size = 0x8, scoped, tag = 'scoped memory for tpu_custom_call.1']
    #allocation5 [shape = 'u8[65536]{0}', space=vmem, size = 0x10000, scoped, tag = 'input window, operand 1, single buffered']
    #allocation6 [shape = 's32[1]{0}', space=sflag, size = 0x4, scoped, tag = 'scoped memory for tpu_custom_call.1']
    #allocation7 [shape = 'u8[65536]{0}', space=vmem, size = 0x10000, scoped, tag = 'input window, operand 3, single buffered']
    #allocation8 [shape = 'u8[131072]{0}', space=vmem, size = 0x20000, scoped, tag = 'output window, operand 0']
    %12 = vsyncpa [#allocation3], 0
    %s13 = scalar_lea.sflag [#allocation3], 1
    %14 = vsyncpa %s13, 0
    %15 = vsyncpa [#allocation6], 0
    %16 = vsyncpa [#allocation4], 0
    %s17 = scalar_lea.sflag [#allocation4], 1
    %18 = vsyncpa %s17, 0
    loop: start=0, step=1, limit=4
    $region2: #{tpu_custom_call.1} parent=1 // loop_pre_header
      _
    $region3: #{tpu_custom_call.1} parent=1 // loop_header
      %s20 = sphi 0, %s24
      %p21 = scmp.ge.s32.totalorder %s20, 4
      %s30 = sphi 0, %s32
      %s33 = sphi 0, %s30
      %s34 = sphi 0, %s33
      %s50 = sphi 0, %s34
      %s54 = sphi 0, %s54
      %s56 = sphi 0, %s54
      %s57 = sphi 0, %s56
      %s71 = sphi 0, %s57
      %s75 = sphi 0, %s75
      %s77 = sphi 0, %s75
      %s78 = sphi 0, %s77
      %s92 = sphi 0, %s78
      %s96 = sphi 0, %s96
      %s98 = sphi 0, %s96
      %s99 = sphi 0, %s98
      %s113 = sphi 0, %s99
      %s117 = sphi 0, %s117
      %s119 = sphi 0, %s117
      %s120 = sphi 0, %s119
      %s134 = sphi 0, %s120
      %s138 = sphi 0, %s138
      %s140 = sphi 0, %s138
      %s141 = sphi 0, %s140
      %s155 = sphi 0, %s141
      %s159 = sphi 0, %s159
      %s161 = sphi 0, %s159
      %s162 = sphi 0, %s161
      %s176 = sphi 0, %s162
      %s182 = sphi 0, %s184
      %s185 = sphi 0, %s182
      %s186 = sphi 0, %s185
      %s202 = sphi 0, %s186
    $region4: #{tpu_custom_call.1} parent=1 // loop_header_branch
      %23 = sbr.rel (%p21) target = $region8
    $region5: #{tpu_custom_call.1} parent=1 // loop_body
      %s25 = ssub.s32 %s20, 1
      %s26 = ssub.s32 %s20, 2
      %s27 = sadd.s32 %s20, 1
      %s28 = ssub.s32 %s20, %s27
      %p29 = scmp.eq.s32.totalorder %s28, 0
      %s31 = sadd.s32 %s30, 1
      %s32 = scalar_select %p29, %s30, %s31
      %p35 = pneg %p29
      %p36 = scmp.eq.s32.totalorder %s20, 1
      %p37 = por %p35, %p36
      %p38 = scmp.ne.s32.totalorder %s30, %s33
      %p39 = scmp.eq.s32.totalorder %s20, 0
      %p40 = por %p38, %p39
      %p41 = scmp.ne.s32.totalorder %s30, %s33
      %p42 = scmp.eq.s32.totalorder %s25, 1
      %p43 = por %p41, %p42
      %p44 = scmp.ne.s32.totalorder %s33, %s34
      %p45 = scmp.eq.s32.totalorder %s25, 0
      %p46 = por %p44, %p45
      %p47 = scmp.ne.s32.totalorder %s33, %s34
      %p48 = scmp.eq.s32.totalorder %s26, 1
      %p49 = por %p47, %p48
      %p51 = scmp.ne.s32.totalorder %s34, %s50
      %p52 = scmp.eq.s32.totalorder %s26, 0
      %p53 = por %p51, %p52
      %s55 = sadd.s32 %s54, 1
      %p58 = scmp.eq.s32.totalorder %s20, 1
      %p59 = scmp.ne.s32.totalorder %s54, %s56
      %p60 = scmp.eq.s32.totalorder %s20, 0
      %p61 = por %p59, %p60
      %p62 = scmp.ne.s32.totalorder %s54, %s56
      %p63 = scmp.eq.s32.totalorder %s25, 1
      %p64 = por %p62, %p63
      %p65 = scmp.ne.s32.totalorder %s56, %s57
      %p66 = scmp.eq.s32.totalorder %s25, 0
      %p67 = por %p65, %p66
      %p68 = scmp.ne.s32.totalorder %s56, %s57
      %p69 = scmp.eq.s32.totalorder %s26, 1
      %p70 = por %p68, %p69
      %p72 = scmp.ne.s32.totalorder %s57, %s71
      %p73 = scmp.eq.s32.totalorder %s26, 0
      %p74 = por %p72, %p73
      %s76 = sadd.s32 %s75, 1
      %p79 = scmp.eq.s32.totalorder %s20, 1
      %p80 = scmp.ne.s32.totalorder %s75, %s77
      %p81 = scmp.eq.s32.totalorder %s20, 0
      %p82 = por %p80, %p81
      %p83 = scmp.ne.s32.totalorder %s75, %s77
      %p84 = scmp.eq.s32.totalorder %s25, 1
      %p85 = por %p83, %p84
      %p86 = scmp.ne.s32.totalorder %s77, %s78
      %p87 = scmp.eq.s32.totalorder %s25, 0
      %p88 = por %p86, %p87
      %p89 = scmp.ne.s32.totalorder %s77, %s78
      %p90 = scmp.eq.s32.totalorder %s26, 1
      %p91 = por %p89, %p90
      %p93 = scmp.ne.s32.totalorder %s78, %s92
      %p94 = scmp.eq.s32.totalorder %s26, 0
      %p95 = por %p93, %p94
      %s97 = sadd.s32 %s96, 1
      %p100 = scmp.eq.s32.totalorder %s20, 1
      %p101 = scmp.ne.s32.totalorder %s96, %s98
      %p102 = scmp.eq.s32.totalorder %s20, 0
      %p103 = por %p101, %p102
      %p104 = scmp.ne.s32.totalorder %s96, %s98
      %p105 = scmp.eq.s32.totalorder %s25, 1
      %p106 = por %p104, %p105
      %p107 = scmp.ne.s32.totalorder %s98, %s99
      %p108 = scmp.eq.s32.totalorder %s25, 0
      %p109 = por %p107, %p108
      %p110 = scmp.ne.s32.totalorder %s98, %s99
      %p111 = scmp.eq.s32.totalorder %s26, 1
      %p112 = por %p110, %p111
      %p114 = scmp.ne.s32.totalorder %s99, %s113
      %p115 = scmp.eq.s32.totalorder %s26, 0
      %p116 = por %p114, %p115
      %s118 = sadd.s32 %s117, 1
      %p121 = scmp.eq.s32.totalorder %s20, 1
      %p122 = scmp.ne.s32.totalorder %s117, %s119
      %p123 = scmp.eq.s32.totalorder %s20, 0
      %p124 = por %p122, %p123
      %p125 = scmp.ne.s32.totalorder %s117, %s119
      %p126 = scmp.eq.s32.totalorder %s25, 1
      %p127 = por %p125, %p126
      %p128 = scmp.ne.s32.totalorder %s119, %s120
      %p129 = scmp.eq.s32.totalorder %s25, 0
      %p130 = por %p128, %p129
      %p131 = scmp.ne.s32.totalorder %s119, %s120
      %p132 = scmp.eq.s32.totalorder %s26, 1
      %p133 = por %p131, %p132
      %p135 = scmp.ne.s32.totalorder %s120, %s134
      %p136 = scmp.eq.s32.totalorder %s26, 0
      %p137 = por %p135, %p136
      %s139 = sadd.s32 %s138, 1
      %p142 = scmp.eq.s32.totalorder %s20, 1
      %p143 = scmp.ne.s32.totalorder %s138, %s140
      %p144 = scmp.eq.s32.totalorder %s20, 0
      %p145 = por %p143, %p144
      %p146 = scmp.ne.s32.totalorder %s138, %s140
      %p147 = scmp.eq.s32.totalorder %s25, 1
      %p148 = por %p146, %p147
      %p149 = scmp.ne.s32.totalorder %s140, %s141
      %p150 = scmp.eq.s32.totalorder %s25, 0
      %p151 = por %p149, %p150
      %p152 = scmp.ne.s32.totalorder %s140, %s141
      %p153 = scmp.eq.s32.totalorder %s26, 1
      %p154 = por %p152, %p153
      %p156 = scmp.ne.s32.totalorder %s141, %s155
      %p157 = scmp.eq.s32.totalorder %s26, 0
      %p158 = por %p156, %p157
      %s160 = sadd.s32 %s159, 1
      %p163 = scmp.eq.s32.totalorder %s20, 1
      %p164 = scmp.ne.s32.totalorder %s159, %s161
      %p165 = scmp.eq.s32.totalorder %s20, 0
      %p166 = por %p164, %p165
      %p167 = scmp.ne.s32.totalorder %s159, %s161
      %p168 = scmp.eq.s32.totalorder %s25, 1
      %p169 = por %p167, %p168
      %p170 = scmp.ne.s32.totalorder %s161, %s162
      %p171 = scmp.eq.s32.totalorder %s25, 0
      %p172 = por %p170, %p171
      %p173 = scmp.ne.s32.totalorder %s161, %s162
      %p174 = scmp.eq.s32.totalorder %s26, 1
      %p175 = por %p173, %p174
      %p177 = scmp.ne.s32.totalorder %s162, %s176
      %p178 = scmp.eq.s32.totalorder %s26, 0
      %p179 = por %p177, %p178
      %s180 = ssub.s32 %s20, %s27
      %p181 = scmp.eq.s32.totalorder %s180, 0
      %s183 = sadd.s32 %s182, 1
      %s184 = scalar_select %p181, %s182, %s183
      %p187 = pneg %p181
      %p188 = scmp.eq.s32.totalorder %s20, 1
      %p189 = por %p187, %p188
      %p190 = scmp.ne.s32.totalorder %s182, %s185
      %p191 = scmp.eq.s32.totalorder %s20, 0
      %p192 = por %p190, %p191
      %p193 = scmp.ne.s32.totalorder %s182, %s185
      %p194 = scmp.eq.s32.totalorder %s25, 1
      %p195 = por %p193, %p194
      %p196 = scmp.ne.s32.totalorder %s185, %s186
      %p197 = scmp.eq.s32.totalorder %s25, 0
      %p198 = por %p196, %p197
      %p199 = scmp.ne.s32.totalorder %s185, %s186
      %p200 = scmp.eq.s32.totalorder %s26, 1
      %p201 = por %p199, %p200
      %p203 = scmp.ne.s32.totalorder %s186, %s202
      %p204 = scmp.eq.s32.totalorder %s26, 0
      %p205 = por %p203, %p204
      %p206 = scmp.le.s32.totalorder 1, %s20
      %p207 = scmp.lt.s32.totalorder %s20, 3
      %p208 = pnand %p206, %p207
      %p209 = pneg %p208
      // Predicated region
      $region9: #{tpu_custom_call.1} parent=5 // pred_check
        _
      $region10: #{tpu_custom_call.1} parent=5 // pred_check_branch
        %211 = sbr.rel (%p208) target = $region12
      $region11: #{tpu_custom_call.1} parent=5 // pred_region
        %s212 = ssub.s32 %s20, 1
        // Predicated region
        $region13: #{tpu_custom_call.1} parent=11 // pred_check
          %p213 = pneg %p67
        $region14: #{tpu_custom_call.1} parent=11 // pred_check_branch
          %215 = sbr.rel (%p213) target = $region16
        $region15: #{tpu_custom_call.1} parent=11 // pred_region
          %s217 = ssub.s32 2048, 2048
          %218 = vsyncadd [#allocation6], %s217
          %s219 = sshll.u32 [#allocation5], 4
          %s220 = int_to_ptr.vmem [resolvable:$true] %s219
          %225 = dma.hbm_to_vmem [thread:$0]  %s1, 2048, %s220, [#allocation6], 128, 128, 8
        $region16: #{tpu_custom_call.1} parent=11 // pred_fallthru
          _
        // Predicated region
        $region17: #{tpu_custom_call.1} parent=11 // pred_check
          %p226 = pneg %p88
        $region18: #{tpu_custom_call.1} parent=11 // pred_check_branch
          %228 = sbr.rel (%p226) target = $region20
        $region19: #{tpu_custom_call.1} parent=11 // pred_region
          _
        $region20: #{tpu_custom_call.1} parent=11 // pred_fallthru
          _
        // Predicated region
        $region21: #{tpu_custom_call.1} parent=11 // pred_check
          %p229 = pneg %p109
        $region22: #{tpu_custom_call.1} parent=11 // pred_check_branch
          %231 = sbr.rel (%p229) target = $region24
        $region23: #{tpu_custom_call.1} parent=11 // pred_region
          %s233 = ssub.s32 2048, 2048
          %234 = vsyncadd [#allocation6], %s233
          %s235 = sshll.u32 [#allocation7], 4
          %s236 = int_to_ptr.vmem [resolvable:$true] %s235
          %241 = dma.hbm_to_vmem [thread:$0]  %s3, 2048, %s236, [#allocation6], 64, 64, 4
        $region24: #{tpu_custom_call.1} parent=11 // pred_fallthru
          _
        // Predicated region
        $region25: #{tpu_custom_call.1} parent=11 // pred_check
          %p242 = pneg %p130
        $region26: #{tpu_custom_call.1} parent=11 // pred_check_branch
          %244 = sbr.rel (%p242) target = $region28
        $region27: #{tpu_custom_call.1} parent=11 // pred_region
          _
        $region28: #{tpu_custom_call.1} parent=11 // pred_fallthru
          _
        // Predicated region
        $region29: #{tpu_custom_call.1} parent=11 // pred_check
          %p245 = pneg %p151
        $region30: #{tpu_custom_call.1} parent=11 // pred_check_branch
          %247 = sbr.rel (%p245) target = $region32
        $region31: #{tpu_custom_call.1} parent=11 // pred_region
          _
        $region32: #{tpu_custom_call.1} parent=11 // pred_fallthru
          _
        // Predicated region
        $region33: #{tpu_custom_call.1} parent=11 // pred_check
          %p248 = pneg %p172
        $region34: #{tpu_custom_call.1} parent=11 // pred_check_branch
          %250 = sbr.rel (%p248) target = $region36
        $region35: #{tpu_custom_call.1} parent=11 // pred_region
          _
        $region36: #{tpu_custom_call.1} parent=11 // pred_fallthru
          _
      $region12: #{tpu_custom_call.1} parent=5 // pred_fallthru
        _
      %p251 = scmp.lt.s32.totalorder %s20, 2
      // Predicated region
      $region37: #{tpu_custom_call.1} parent=5 // pred_check
        %p252 = pneg %p251
      $region38: #{tpu_custom_call.1} parent=5 // pred_check_branch
        %254 = sbr.rel (%p252) target = $region40
      $region39: #{tpu_custom_call.1} parent=5 // pred_region
        // Predicated region
        $region41: #{tpu_custom_call.1} parent=39 // pred_check
          %p255 = pneg %p40
        $region42: #{tpu_custom_call.1} parent=39 // pred_check_branch
          %257 = sbr.rel (%p255) target = $region44
        $region43: #{tpu_custom_call.1} parent=39 // pred_region
          %s258 = sand.u32 %s30, 1
          %s259 = scalar_lea.sflag [#allocation3], %s258
          %s260 = sand.u32 %s30, 1
          %s261 = smul.addr %s260, 128
          %s262 = scalar_lea.vmem [#allocation2], %s261
          %s263 = smul.u32 16, %s20
          %s265 = ssub.s32 2048, 2048
          %266 = vsyncadd %s259, %s265
          %s267 = smul.addr %s263, 128
          %s268 = scalar_lea.hbm %s0, %s267
          %s269 = sshll.u32 %s262, 4
          %s270 = int_to_ptr.vmem [resolvable:$true] %s269
          %275 = dma.hbm_to_vmem [thread:$0]  %s268, 2048, %s270, %s259, 128, 128, 8
        $region44: #{tpu_custom_call.1} parent=39 // pred_fallthru
          _
      $region40: #{tpu_custom_call.1} parent=5 // pred_fallthru
        _
      %p276 = scmp.le.s32.totalorder 1, %s20
      %p277 = scmp.lt.s32.totalorder %s20, 3
      %p278 = pnand %p276, %p277
      %p279 = pneg %p278
      // Predicated region
      $region45: #{tpu_custom_call.1} parent=5 // pred_check
        _
      $region46: #{tpu_custom_call.1} parent=5 // pred_check_branch
        %281 = sbr.rel (%p278) target = $region48
      $region47: #{tpu_custom_call.1} parent=5 // pred_region
        %s282 = ssub.s32 %s20, 1
        %s283 = sand.u32 %s33, 1
        %s284 = scalar_lea.sflag [#allocation3], %s283
        %s285 = sand.u32 %s33, 1
        %s286 = smul.addr %s285, 128
        %s287 = scalar_lea.vmem [#allocation2], %s286
        // Predicated region
        $region49: #{tpu_custom_call.1} parent=47 // pred_check
          %p288 = pneg %p46
        $region50: #{tpu_custom_call.1} parent=47 // pred_check_branch
          %290 = sbr.rel (%p288) target = $region52
        $region51: #{tpu_custom_call.1} parent=47 // pred_region
          %291 = dma.done %s284, 2048
        $region52: #{tpu_custom_call.1} parent=47 // pred_fallthru
          _
        // Predicated region
        $region53: #{tpu_custom_call.1} parent=47 // pred_check
          %p292 = pneg %p67
        $region54: #{tpu_custom_call.1} parent=47 // pred_check_branch
          %294 = sbr.rel (%p292) target = $region56
        $region55: #{tpu_custom_call.1} parent=47 // pred_region
          %295 = dma.done [#allocation6], 2048
        $region56: #{tpu_custom_call.1} parent=47 // pred_fallthru
          _
        // Predicated region
        $region57: #{tpu_custom_call.1} parent=47 // pred_check
          %p296 = pneg %p109
        $region58: #{tpu_custom_call.1} parent=47 // pred_check_branch
          %298 = sbr.rel (%p296) target = $region60
        $region59: #{tpu_custom_call.1} parent=47 // pred_region
          %299 = dma.done [#allocation6], 2048
        $region60: #{tpu_custom_call.1} parent=47 // pred_fallthru
          _
        %s300 = sand.u32 %s33, 1
        %s301 = scalar_lea.sflag [#allocation3], %s300
        %s302 = sand.u32 %s33, 1
        %s303 = smul.addr %s302, 128
        %s304 = scalar_lea.vmem [#allocation2], %s303
        %p305 = pneg %p46
        %p306 = pneg %p43
        %p307 = pneg %p67
        %p308 = pneg %p64
        %p309 = pneg %p88
        %p310 = pneg %p85
        %p311 = pneg %p109
        %p312 = pneg %p106
        %p313 = pneg %p130
        %p314 = pneg %p127
        %p315 = pneg %p151
        %p316 = pneg %p148
        %p317 = pneg %p172
        %p318 = pneg %p169
        %p319 = pneg %p198
        %p320 = pneg %p195
        %s321 = sand.u32 %s185, 1
        %s322 = scalar_lea.sflag [#allocation4], %s321
        %s323 = sand.u32 %s185, 1
        %s324 = smul.addr %s323, 128
        %s325 = scalar_lea.vmem [#allocation8], %s324
        %s326 = smul.u32 16, %s25
        %s327 = smul.u32 16, %s25
        %v329 = vld [vmem:[%s287] sm:$0xff]
        %v330 = vld [vmem:[%s287 + $0x8] sm:$0xff]
        %v331 = vld [vmem:[%s287 + $0x10] sm:$0xff]
        %v332 = vld [vmem:[%s287 + $0x18] sm:$0xff]
        %v333 = vld [vmem:[%s287 + $0x20] sm:$0xff]
        %v334 = vld [vmem:[%s287 + $0x28] sm:$0xff]
        %v335 = vld [vmem:[%s287 + $0x30] sm:$0xff]
        %v336 = vld [vmem:[%s287 + $0x38] sm:$0xff]
        %v337 = vld [vmem:[%s287 + $0x40] sm:$0xff]
        %v338 = vld [vmem:[%s287 + $0x48] sm:$0xff]
        %v339 = vld [vmem:[%s287 + $0x50] sm:$0xff]
        %v340 = vld [vmem:[%s287 + $0x58] sm:$0xff]
        %v341 = vld [vmem:[%s287 + $0x60] sm:$0xff]
        %v342 = vld [vmem:[%s287 + $0x68] sm:$0xff]
        %v343 = vld [vmem:[%s287 + $0x70] sm:$0xff]
        %v344 = vld [vmem:[%s287 + $0x78] sm:$0xff]
        %v345 = vpack.c.bf16 %v330, %v329
        %v346 = vpack.c.bf16 %v332, %v331
        %v347 = vpack.c.bf16 %v334, %v333
        %v348 = vpack.c.bf16 %v336, %v335
        %v349 = vpack.c.bf16 %v338, %v337
        %v350 = vpack.c.bf16 %v340, %v339
        %v351 = vpack.c.bf16 %v342, %v341
        %v352 = vpack.c.bf16 %v344, %v343
        %v353 = vld [vmem:[#allocation5] sm:$0xff]
        %v354 = vld [vmem:[#allocation5 + $0x8] sm:$0xff]
        %v355 = vld [vmem:[#allocation5 + $0x10] sm:$0xff]
        %v356 = vld [vmem:[#allocation5 + $0x18] sm:$0xff]
        %v357 = vld [vmem:[#allocation5 + $0x20] sm:$0xff]
        %v358 = vld [vmem:[#allocation5 + $0x28] sm:$0xff]
        %v359 = vld [vmem:[#allocation5 + $0x30] sm:$0xff]
        %v360 = vld [vmem:[#allocation5 + $0x38] sm:$0xff]
        %v361 = vld [vmem:[#allocation5 + $0x40] sm:$0xff]
        %v362 = vld [vmem:[#allocation5 + $0x48] sm:$0xff]
        %v363 = vld [vmem:[#allocation5 + $0x50] sm:$0xff]
        %v364 = vld [vmem:[#allocation5 + $0x58] sm:$0xff]
        %v365 = vld [vmem:[#allocation5 + $0x60] sm:$0xff]
        %v366 = vld [vmem:[#allocation5 + $0x68] sm:$0xff]
        %v367 = vld [vmem:[#allocation5 + $0x70] sm:$0xff]
        %v368 = vld [vmem:[#allocation5 + $0x78] sm:$0xff]
        %v369 = vld [vmem:[%s2] sm:$0x3]
        %v371 = vlaneseq
        %v372 = vshrl.u32 %v371, 7
        %v373 = vsub.s32 0, %v372
        %v374 = vrot.slane %v369, %v373
        %v375 = vlaneseq
        %v376 = vshrl.u32 %v375, 7
        %v377 = vsub.s32 1, %v376
        %v378 = vrot.slane %v369, %v377
        %v397 = vunpack.c.l.b16 %v353
        %v398 = vunpack.c.h.b16 %v353
        %v399 = vunpack.c.l.b16 %v354
        %v400 = vunpack.c.h.b16 %v354
        %v401 = vunpack.c.l.b16 %v355
        %v402 = vunpack.c.h.b16 %v355
        %v403 = vunpack.c.l.b16 %v356
        %v404 = vunpack.c.h.b16 %v356
        %v405 = vunpack.c.l.b16 %v357
        %v406 = vunpack.c.h.b16 %v357
        %v407 = vunpack.c.l.b16 %v358
        %v408 = vunpack.c.h.b16 %v358
        %v409 = vunpack.c.l.b16 %v359
        %v410 = vunpack.c.h.b16 %v359
        %v411 = vunpack.c.l.b16 %v360
        %v412 = vunpack.c.h.b16 %v360
        %v413 = vunpack.c.l.b16 %v361
        %v414 = vunpack.c.h.b16 %v361
        %v415 = vunpack.c.l.b16 %v362
        %v416 = vunpack.c.h.b16 %v362
        %v417 = vunpack.c.l.b16 %v363
        %v418 = vunpack.c.h.b16 %v363
        %v419 = vunpack.c.l.b16 %v364
        %v420 = vunpack.c.h.b16 %v364
        %v421 = vunpack.c.l.b16 %v365
        %v422 = vunpack.c.h.b16 %v365
        %v423 = vunpack.c.l.b16 %v366
        %v424 = vunpack.c.h.b16 %v366
        %v425 = vunpack.c.l.b16 %v367
        %v426 = vunpack.c.h.b16 %v367
        %v427 = vunpack.c.l.b16 %v368
        %v428 = vunpack.c.h.b16 %v368
        %v429 = vpack.c.b16 %v399, %v397
        %v430 = vpack.c.b16 %v400, %v398
        %v431 = vpack.c.b16 %v403, %v401
        %v432 = vpack.c.b16 %v404, %v402
        %v433 = vpack.c.b16 %v407, %v405
        %v434 = vpack.c.b16 %v408, %v406
        %v435 = vpack.c.b16 %v411, %v409
        %v436 = vpack.c.b16 %v412, %v410
        %v437 = vpack.c.b16 %v415, %v413
        %v438 = vpack.c.b16 %v416, %v414
        %v439 = vpack.c.b16 %v419, %v417
        %v440 = vpack.c.b16 %v420, %v418
        %v441 = vpack.c.b16 %v423, %v421
        %v442 = vpack.c.b16 %v424, %v422
        %v443 = vpack.c.b16 %v427, %v425
        %v444 = vpack.c.b16 %v428, %v426
        %461 = vmatprep.subr.bf16.mxu0 %v430
        %462 = vmatpush1.bf16.msra.mxu0 %v429
        %463 = vmatprep.subr.bf16.mxu0 %v432
        %464 = vmatpush1.bf16.msra.mxu0 %v431
        %465 = vmatprep.subr.bf16.mxu0 %v434
        %466 = vmatpush1.bf16.msra.mxu0 %v433
        %467 = vmatprep.subr.bf16.mxu0 %v436
        %468 = vmatpush1.bf16.msra.mxu0 %v435
        %469 = vmatprep.subr.bf16.mxu0 %v438
        %470 = vmatpush1.bf16.msra.mxu0 %v437
        %471 = vmatprep.subr.bf16.mxu0 %v440
        %472 = vmatpush1.bf16.msra.mxu0 %v439
        %473 = vmatprep.subr.bf16.mxu0 %v442
        %474 = vmatpush1.bf16.msra.mxu0 %v441
        %475 = vmatprep.subr.bf16.mxu0 %v444
        %476 = vmatpush1.bf16.msra.mxu0 %v443
        %477 = vmatprep.subr.bf16.mxu0 0
        %478 = vmatpush1.bf16.msra.mxu0 0
        %479 = vmatprep.subr.bf16.mxu0 0
        %480 = vmatpush1.bf16.msra.mxu0 0
        %481 = vmatprep.subr.bf16.mxu0 0
        %482 = vmatpush1.bf16.msra.mxu0 0
        %483 = vmatprep.subr.bf16.mxu0 0
        %484 = vmatpush1.bf16.msra.mxu0 0
        %485 = vmatprep.subr.bf16.mxu0 0
        %486 = vmatpush1.bf16.msra.mxu0 0
        %487 = vmatprep.subr.bf16.mxu0 0
        %488 = vmatpush1.bf16.msra.mxu0 0
        %489 = vmatprep.subr.bf16.mxu0 0
        %490 = vmatpush1.bf16.msra.mxu0 0
        %491 = vmatprep.subr.bf16.mxu0 0
        %492 = vmatpush1.bf16.msra.mxu0 0
        %493 = vmatprep.mubr.bf16.mxu0 0
        %494 = vmatmul.mubr.bf16.gmra.mrb[0].mxu0 %v345
        %v495 = vpop.f32.mrb[0].mxu0
        %v496 = vadd.f32 %v374, %v495
        %v497 = vpop.f32.mrb[0].mxu0
        %v498 = vadd.f32 %v378, %v497
        %v499 = vpop.f32.mrb[0].mxu0
        %v500 = vadd.f32 %v374, %v499
        %v501 = vpop.f32.mrb[0].mxu0
        %v502 = vadd.f32 %v378, %v501
        %503 = vmatprep.mubr.bf16.mxu0 0
        %504 = vmatmul.mubr.bf16.gmra.mrb[0].mxu0 %v346
        %v505 = vpop.f32.mrb[0].mxu0
        %v506 = vadd.f32 %v374, %v505
        %v507 = vpop.f32.mrb[0].mxu0
        %v508 = vadd.f32 %v378, %v507
        %v509 = vpop.f32.mrb[0].mxu0
        %v510 = vadd.f32 %v374, %v509
        %v511 = vpop.f32.mrb[0].mxu0
        %v512 = vadd.f32 %v378, %v511
        %513 = vmatprep.mubr.bf16.mxu0 0
        %514 = vmatmul.mubr.bf16.gmra.mrb[0].mxu0 %v347
        %v515 = vpop.f32.mrb[0].mxu0
        %v516 = vadd.f32 %v374, %v515
        %v517 = vpop.f32.mrb[0].mxu0
        %v518 = vadd.f32 %v378, %v517
        %v519 = vpop.f32.mrb[0].mxu0
        %v520 = vadd.f32 %v374, %v519
        %v521 = vpop.f32.mrb[0].mxu0
        %v522 = vadd.f32 %v378, %v521
        %523 = vmatprep.mubr.bf16.mxu0 0
        %524 = vmatmul.mubr.bf16.gmra.mrb[0].mxu0 %v348
        %v525 = vpop.f32.mrb[0].mxu0
        %v526 = vadd.f32 %v374, %v525
        %v527 = vpop.f32.mrb[0].mxu0
        %v528 = vadd.f32 %v378, %v527
        %v529 = vpop.f32.mrb[0].mxu0
        %v530 = vadd.f32 %v374, %v529
        %v531 = vpop.f32.mrb[0].mxu0
        %v532 = vadd.f32 %v378, %v531
        %533 = vmatprep.mubr.bf16.mxu0 0
        %534 = vmatmul.mubr.bf16.gmra.mrb[0].mxu0 %v349
        %v535 = vpop.f32.mrb[0].mxu0
        %v536 = vadd.f32 %v374, %v535
        %v537 = vpop.f32.mrb[0].mxu0
        %v538 = vadd.f32 %v378, %v537
        %v539 = vpop.f32.mrb[0].mxu0
        %v540 = vadd.f32 %v374, %v539
        %v541 = vpop.f32.mrb[0].mxu0
        %v542 = vadd.f32 %v378, %v541
        %543 = vmatprep.mubr.bf16.mxu0 0
        %544 = vmatmul.mubr.bf16.gmra.mrb[0].mxu0 %v350
        %v545 = vpop.f32.mrb[0].mxu0
        %v546 = vadd.f32 %v374, %v545
        %v547 = vpop.f32.mrb[0].mxu0
        %v548 = vadd.f32 %v378, %v547
        %v549 = vpop.f32.mrb[0].mxu0
        %v550 = vadd.f32 %v374, %v549
        %v551 = vpop.f32.mrb[0].mxu0
        %v552 = vadd.f32 %v378, %v551
        %553 = vmatprep.mubr.bf16.mxu0 0
        %554 = vmatmul.mubr.bf16.gmra.mrb[0].mxu0 %v351
        %v555 = vpop.f32.mrb[0].mxu0
        %v556 = vadd.f32 %v374, %v555
        %v557 = vpop.f32.mrb[0].mxu0
        %v558 = vadd.f32 %v378, %v557
        %v559 = vpop.f32.mrb[0].mxu0
        %v560 = vadd.f32 %v374, %v559
        %v561 = vpop.f32.mrb[0].mxu0
        %v562 = vadd.f32 %v378, %v561
        %563 = vmatprep.mubr.bf16.mxu0 0
        %564 = vmatmul.mubr.bf16.gmra.mrb[0].mxu0 %v352
        %v565 = vpop.f32.mrb[0].mxu0
        %v566 = vadd.f32 %v374, %v565
        %v567 = vpop.f32.mrb[0].mxu0
        %v568 = vadd.f32 %v378, %v567
        %v569 = vpop.f32.mrb[0].mxu0
        %v570 = vadd.f32 %v374, %v569
        %v571 = vpop.f32.mrb[0].mxu0
        %v572 = vadd.f32 %v378, %v571
        %573 = vdwg.mxu0
        %v574 = vmax.f32 %v496, 0.0
        %v575 = vmax.f32 %v498, 0.0
        %v576 = vmax.f32 %v500, 0.0
        %v577 = vmax.f32 %v502, 0.0
        %v578 = vmax.f32 %v506, 0.0
        %v579 = vmax.f32 %v508, 0.0
        %v580 = vmax.f32 %v510, 0.0
        %v581 = vmax.f32 %v512, 0.0
        %v582 = vmax.f32 %v516, 0.0
        %v583 = vmax.f32 %v518, 0.0
        %v584 = vmax.f32 %v520, 0.0
        %v585 = vmax.f32 %v522, 0.0
        %v586 = vmax.f32 %v526, 0.0
        %v587 = vmax.f32 %v528, 0.0
        %v588 = vmax.f32 %v530, 0.0
        %v589 = vmax.f32 %v532, 0.0
        %v590 = vmax.f32 %v536, 0.0
        %v591 = vmax.f32 %v538, 0.0
        %v592 = vmax.f32 %v540, 0.0
        %v593 = vmax.f32 %v542, 0.0
        %v594 = vmax.f32 %v546, 0.0
        %v595 = vmax.f32 %v548, 0.0
        %v596 = vmax.f32 %v550, 0.0
        %v597 = vmax.f32 %v552, 0.0
        %v598 = vmax.f32 %v556, 0.0
        %v599 = vmax.f32 %v558, 0.0
        %v600 = vmax.f32 %v560, 0.0
        %v601 = vmax.f32 %v562, 0.0
        %v602 = vmax.f32 %v566, 0.0
        %v603 = vmax.f32 %v568, 0.0
        %v604 = vmax.f32 %v570, 0.0
        %v605 = vmax.f32 %v572, 0.0
        %v606 = vpack.c.bf16 %v576, %v574
        %v607 = vpack.c.bf16 %v577, %v575
        %v608 = vpack.c.bf16 %v580, %v578
        %v609 = vpack.c.bf16 %v581, %v579
        %v610 = vpack.c.bf16 %v584, %v582
        %v611 = vpack.c.bf16 %v585, %v583
        %v612 = vpack.c.bf16 %v588, %v586
        %v613 = vpack.c.bf16 %v589, %v587
        %v614 = vpack.c.bf16 %v592, %v590
        %v615 = vpack.c.bf16 %v593, %v591
        %v616 = vpack.c.bf16 %v596, %v594
        %v617 = vpack.c.bf16 %v597, %v595
        %v618 = vpack.c.bf16 %v600, %v598
        %v619 = vpack.c.bf16 %v601, %v599
        %v620 = vpack.c.bf16 %v604, %v602
        %v621 = vpack.c.bf16 %v605, %v603
        %v622 = vld [vmem:[#allocation7] sm:$0xf]
        %v623 = vld [vmem:[#allocation7 + $0x4] sm:$0xf]
        %v624 = vld [vmem:[#allocation7 + $0x8] sm:$0xf]
        %v625 = vld [vmem:[#allocation7 + $0xc] sm:$0xf]
        %v626 = vld [vmem:[#allocation7 + $0x10] sm:$0xf]
        %v627 = vld [vmem:[#allocation7 + $0x14] sm:$0xf]
        %v628 = vld [vmem:[#allocation7 + $0x18] sm:$0xf]
        %v629 = vld [vmem:[#allocation7 + $0x1c] sm:$0xf]
        %v630 = vld [vmem:[#allocation7 + $0x20] sm:$0xf]
        %v631 = vld [vmem:[#allocation7 + $0x24] sm:$0xf]
        %v632 = vld [vmem:[#allocation7 + $0x28] sm:$0xf]
        %v633 = vld [vmem:[#allocation7 + $0x2c] sm:$0xf]
        %v634 = vld [vmem:[#allocation7 + $0x30] sm:$0xf]
        %v635 = vld [vmem:[#allocation7 + $0x34] sm:$0xf]
        %v636 = vld [vmem:[#allocation7 + $0x38] sm:$0xf]
        %v637 = vld [vmem:[#allocation7 + $0x3c] sm:$0xf]
        %v638 = vld [vmem:[#allocation7 + $0x40] sm:$0xf]
        %v639 = vld [vmem:[#allocation7 + $0x44] sm:$0xf]
        %v640 = vld [vmem:[#allocation7 + $0x48] sm:$0xf]
        %v641 = vld [vmem:[#allocation7 + $0x4c] sm:$0xf]
        %v642 = vld [vmem:[#allocation7 + $0x50] sm:$0xf]
        %v643 = vld [vmem:[#allocation7 + $0x54] sm:$0xf]
        %v644 = vld [vmem:[#allocation7 + $0x58] sm:$0xf]
        %v645 = vld [vmem:[#allocation7 + $0x5c] sm:$0xf]
        %v646 = vld [vmem:[#allocation7 + $0x60] sm:$0xf]
        %v647 = vld [vmem:[#allocation7 + $0x64] sm:$0xf]
        %v648 = vld [vmem:[#allocation7 + $0x68] sm:$0xf]
        %v649 = vld [vmem:[#allocation7 + $0x6c] sm:$0xf]
        %v650 = vld [vmem:[#allocation7 + $0x70] sm:$0xf]
        %v651 = vld [vmem:[#allocation7 + $0x74] sm:$0xf]
        %v652 = vld [vmem:[#allocation7 + $0x78] sm:$0xf]
        %v653 = vld [vmem:[#allocation7 + $0x7c] sm:$0xf]
        %v654 = vld [vmem:[%s4] sm:$0x1]
        %v656 = vlaneseq
        %v657 = vshrl.u32 %v656, 7
        %v658 = vsub.s32 0, %v657
        %v659 = vrot.slane %v654, %v658
        %v693 = vunpack.c.l.b16 %v622
        %v694 = vunpack.c.l.b16 %v623
        %v695 = vunpack.c.l.b16 %v624
        %v696 = vunpack.c.l.b16 %v625
        %v697 = vunpack.c.l.b16 %v626
        %v698 = vunpack.c.l.b16 %v627
        %v699 = vunpack.c.l.b16 %v628
        %v700 = vunpack.c.l.b16 %v629
        %v701 = vunpack.c.l.b16 %v630
        %v702 = vunpack.c.l.b16 %v631
        %v703 = vunpack.c.l.b16 %v632
        %v704 = vunpack.c.l.b16 %v633
        %v705 = vunpack.c.l.b16 %v634
        %v706 = vunpack.c.l.b16 %v635
        %v707 = vunpack.c.l.b16 %v636
        %v708 = vunpack.c.l.b16 %v637
        %v709 = vunpack.c.l.b16 %v638
        %v710 = vunpack.c.l.b16 %v639
        %v711 = vunpack.c.l.b16 %v640
        %v712 = vunpack.c.l.b16 %v641
        %v713 = vunpack.c.l.b16 %v642
        %v714 = vunpack.c.l.b16 %v643
        %v715 = vunpack.c.l.b16 %v644
        %v716 = vunpack.c.l.b16 %v645
        %v717 = vunpack.c.l.b16 %v646
        %v718 = vunpack.c.l.b16 %v647
        %v719 = vunpack.c.l.b16 %v648
        %v720 = vunpack.c.l.b16 %v649
        %v721 = vunpack.c.l.b16 %v650
        %v722 = vunpack.c.l.b16 %v651
        %v723 = vunpack.c.l.b16 %v652
        %v724 = vunpack.c.l.b16 %v653
        %v725 = vpack.c.b16 %v694, %v693
        %v726 = vpack.c.b16 %v696, %v695
        %v727 = vpack.c.b16 %v698, %v697
        %v728 = vpack.c.b16 %v700, %v699
        %v729 = vpack.c.b16 %v702, %v701
        %v730 = vpack.c.b16 %v704, %v703
        %v731 = vpack.c.b16 %v706, %v705
        %v732 = vpack.c.b16 %v708, %v707
        %v733 = vpack.c.b16 %v710, %v709
        %v734 = vpack.c.b16 %v712, %v711
        %v735 = vpack.c.b16 %v714, %v713
        %v736 = vpack.c.b16 %v716, %v715
        %v737 = vpack.c.b16 %v718, %v717
        %v738 = vpack.c.b16 %v720, %v719
        %v739 = vpack.c.b16 %v722, %v721
        %v740 = vpack.c.b16 %v724, %v723
        %757 = vmatprep.subr.bf16.mxu0 0
        %758 = vmatpush1.bf16.msra.mxu0 %v725
        %759 = vmatprep.subr.bf16.mxu0 0
        %760 = vmatpush1.bf16.msra.mxu0 %v726
        %761 = vmatprep.subr.bf16.mxu0 0
        %762 = vmatpush1.bf16.msra.mxu0 %v727
        %763 = vmatprep.subr.bf16.mxu0 0
        %764 = vmatpush1.bf16.msra.mxu0 %v728
        %765 = vmatprep.subr.bf16.mxu0 0
        %766 = vmatpush1.bf16.msra.mxu0 %v729
        %767 = vmatprep.subr.bf16.mxu0 0
        %768 = vmatpush1.bf16.msra.mxu0 %v730
        %769 = vmatprep.subr.bf16.mxu0 0
        %770 = vmatpush1.bf16.msra.mxu0 %v731
        %771 = vmatprep.subr.bf16.mxu0 0
        %772 = vmatpush1.bf16.msra.mxu0 %v732
        %773 = vmatprep.subr.bf16.mxu0 0
        %774 = vmatpush1.bf16.msra.mxu0 %v733
        %775 = vmatprep.subr.bf16.mxu0 0
        %776 = vmatpush1.bf16.msra.mxu0 %v734
        %777 = vmatprep.subr.bf16.mxu0 0
        %778 = vmatpush1.bf16.msra.mxu0 %v735
        %779 = vmatprep.subr.bf16.mxu0 0
        %780 = vmatpush1.bf16.msra.mxu0 %v736
        %781 = vmatprep.subr.bf16.mxu0 0
        %782 = vmatpush1.bf16.msra.mxu0 %v737
        %783 = vmatprep.subr.bf16.mxu0 0
        %784 = vmatpush1.bf16.msra.mxu0 %v738
        %785 = vmatprep.subr.bf16.mxu0 0
        %786 = vmatpush1.bf16.msra.mxu0 %v739
        %787 = vmatprep.subr.bf16.mxu0 0
        %788 = vmatpush1.bf16.msra.mxu0 %v740
        %789 = vmatprep.mubr.bf16.mxu0 %v607
        %790 = vmatmul.mubr.bf16.gmra.mrb[0].mxu0 %v606
        %v791 = vpop.f32.mrb[0].mxu0
        %v792 = vadd.f32 %v659, %v791
        %v793 = vpop.f32.mrb[0].mxu0
        %v794 = vpop.f32.mrb[0].mxu0
        %v795 = vadd.f32 %v659, %v794
        %v796 = vpop.f32.mrb[0].mxu0
        %797 = vmatprep.mubr.bf16.mxu0 %v609
        %798 = vmatmul.mubr.bf16.gmra.mrb[0].mxu0 %v608
        %v799 = vpop.f32.mrb[0].mxu0
        %v800 = vadd.f32 %v659, %v799
        %v801 = vpop.f32.mrb[0].mxu0
        %v802 = vpop.f32.mrb[0].mxu0
        %v803 = vadd.f32 %v659, %v802
        %v804 = vpop.f32.mrb[0].mxu0
        %805 = vmatprep.mubr.bf16.mxu0 %v611
        %806 = vmatmul.mubr.bf16.gmra.mrb[0].mxu0 %v610
        %v807 = vpop.f32.mrb[0].mxu0
        %v808 = vadd.f32 %v659, %v807
        %v809 = vpop.f32.mrb[0].mxu0
        %v810 = vpop.f32.mrb[0].mxu0
        %v811 = vadd.f32 %v659, %v810
        %v812 = vpop.f32.mrb[0].mxu0
        %813 = vmatprep.mubr.bf16.mxu0 %v613
        %814 = vmatmul.mubr.bf16.gmra.mrb[0].mxu0 %v612
        %v815 = vpop.f32.mrb[0].mxu0
        %v816 = vadd.f32 %v659, %v815
        %v817 = vpop.f32.mrb[0].mxu0
        %v818 = vpop.f32.mrb[0].mxu0
        %v819 = vadd.f32 %v659, %v818
        %v820 = vpop.f32.mrb[0].mxu0
        %821 = vmatprep.mubr.bf16.mxu0 %v615
        %822 = vmatmul.mubr.bf16.gmra.mrb[0].mxu0 %v614
        %v823 = vpop.f32.mrb[0].mxu0
        %v824 = vadd.f32 %v659, %v823
        %v825 = vpop.f32.mrb[0].mxu0
        %v826 = vpop.f32.mrb[0].mxu0
        %v827 = vadd.f32 %v659, %v826
        %v828 = vpop.f32.mrb[0].mxu0
        %829 = vmatprep.mubr.bf16.mxu0 %v617
        %830 = vmatmul.mubr.bf16.gmra.mrb[0].mxu0 %v616
        %v831 = vpop.f32.mrb[0].mxu0
        %v832 = vadd.f32 %v659, %v831
        %v833 = vpop.f32.mrb[0].mxu0
        %v834 = vpop.f32.mrb[0].mxu0
        %v835 = vadd.f32 %v659, %v834
        %v836 = vpop.f32.mrb[0].mxu0
        %837 = vmatprep.mubr.bf16.mxu0 %v619
        %838 = vmatmul.mubr.bf16.gmra.mrb[0].mxu0 %v618
        %v839 = vpop.f32.mrb[0].mxu0
        %v840 = vadd.f32 %v659, %v839
        %v841 = vpop.f32.mrb[0].mxu0
        %v842 = vpop.f32.mrb[0].mxu0
        %v843 = vadd.f32 %v659, %v842
        %v844 = vpop.f32.mrb[0].mxu0
        %845 = vmatprep.mubr.bf16.mxu0 %v621
        %846 = vmatmul.mubr.bf16.gmra.mrb[0].mxu0 %v620
        %v847 = vpop.f32.mrb[0].mxu0
        %v848 = vadd.f32 %v659, %v847
        %v849 = vpop.f32.mrb[0].mxu0
        %v850 = vpop.f32.mrb[0].mxu0
        %v851 = vadd.f32 %v659, %v850
        %v852 = vpop.f32.mrb[0].mxu0
        %853 = vdwg.mxu0
        %v854 = vadd.f32 %v329, %v792
        %v855 = vadd.f32 %v330, %v795
        %v856 = vadd.f32 %v331, %v800
        %v857 = vadd.f32 %v332, %v803
        %v858 = vadd.f32 %v333, %v808
        %v859 = vadd.f32 %v334, %v811
        %v860 = vadd.f32 %v335, %v816
        %v861 = vadd.f32 %v336, %v819
        %v862 = vadd.f32 %v337, %v824
        %v863 = vadd.f32 %v338, %v827
        %v864 = vadd.f32 %v339, %v832
        %v865 = vadd.f32 %v340, %v835
        %v866 = vadd.f32 %v341, %v840
        %v867 = vadd.f32 %v342, %v843
        %v868 = vadd.f32 %v343, %v848
        %v869 = vadd.f32 %v344, %v851
        %870 = vadd.xlane.f32.xlu0 %v854
        %v871 = vpop.xlane.xlu0 %870
        %872 = vadd.xlane.f32.xlu0 %v855
        %v873 = vpop.xlane.xlu0 %872
        %874 = vadd.xlane.f32.xlu0 %v856
        %v875 = vpop.xlane.xlu0 %874
        %876 = vadd.xlane.f32.xlu0 %v857
        %v877 = vpop.xlane.xlu0 %876
        %878 = vadd.xlane.f32.xlu0 %v858
        %v879 = vpop.xlane.xlu0 %878
        %880 = vadd.xlane.f32.xlu0 %v859
        %v881 = vpop.xlane.xlu0 %880
        %882 = vadd.xlane.f32.xlu0 %v860
        %v883 = vpop.xlane.xlu0 %882
        %884 = vadd.xlane.f32.xlu0 %v861
        %v885 = vpop.xlane.xlu0 %884
        %886 = vadd.xlane.f32.xlu0 %v862
        %v887 = vpop.xlane.xlu0 %886
        %888 = vadd.xlane.f32.xlu0 %v863
        %v889 = vpop.xlane.xlu0 %888
        %890 = vadd.xlane.f32.xlu0 %v864
        %v891 = vpop.xlane.xlu0 %890
        %892 = vadd.xlane.f32.xlu0 %v865
        %v893 = vpop.xlane.xlu0 %892
        %894 = vadd.xlane.f32.xlu0 %v866
        %v895 = vpop.xlane.xlu0 %894
        %896 = vadd.xlane.f32.xlu0 %v867
        %v897 = vpop.xlane.xlu0 %896
        %898 = vadd.xlane.f32.xlu0 %v868
        %v899 = vpop.xlane.xlu0 %898
        %900 = vadd.xlane.f32.xlu0 %v869
        %v901 = vpop.xlane.xlu0 %900
        %v902 = vmul.f32 %v871, 0.0078125
        %v903 = vmul.f32 %v873, 0.0078125
        %v904 = vmul.f32 %v875, 0.0078125
        %v905 = vmul.f32 %v877, 0.0078125
        %v906 = vmul.f32 %v879, 0.0078125
        %v907 = vmul.f32 %v881, 0.0078125
        %v908 = vmul.f32 %v883, 0.0078125
        %v909 = vmul.f32 %v885, 0.0078125
        %v910 = vmul.f32 %v887, 0.0078125
        %v911 = vmul.f32 %v889, 0.0078125
        %v912 = vmul.f32 %v891, 0.0078125
        %v913 = vmul.f32 %v893, 0.0078125
        %v914 = vmul.f32 %v895, 0.0078125
        %v915 = vmul.f32 %v897, 0.0078125
        %v916 = vmul.f32 %v899, 0.0078125
        %v917 = vmul.f32 %v901, 0.0078125
        %v918 = vlaneseq
        %v919 = vand.u32 %v918, 127
        %vm920 = vcmp.lt.s32.totalorder %v919, 128
        %v921 = vsub.f32 %v854, %v902
        %v922 = vsub.f32 %v855, %v903
        %v923 = vsub.f32 %v856, %v904
        %v924 = vsub.f32 %v857, %v905
        %v925 = vsub.f32 %v858, %v906
        %v926 = vsub.f32 %v859, %v907
        %v927 = vsub.f32 %v860, %v908
        %v928 = vsub.f32 %v861, %v909
        %v929 = vsub.f32 %v862, %v910
        %v930 = vsub.f32 %v863, %v911
        %v931 = vsub.f32 %v864, %v912
        %v932 = vsub.f32 %v865, %v913
        %v933 = vsub.f32 %v866, %v914
        %v934 = vsub.f32 %v867, %v915
        %v935 = vsub.f32 %v868, %v916
        %v936 = vsub.f32 %v869, %v917
        %v937 = vsel %vm920, %v921, 0.0
        %v938 = vsel %vm920, %v922, 0.0
        %v939 = vsel %vm920, %v923, 0.0
        %v940 = vsel %vm920, %v924, 0.0
        %v941 = vsel %vm920, %v925, 0.0
        %v942 = vsel %vm920, %v926, 0.0
        %v943 = vsel %vm920, %v927, 0.0
        %v944 = vsel %vm920, %v928, 0.0
        %v945 = vsel %vm920, %v929, 0.0
        %v946 = vsel %vm920, %v930, 0.0
        %v947 = vsel %vm920, %v931, 0.0
        %v948 = vsel %vm920, %v932, 0.0
        %v949 = vsel %vm920, %v933, 0.0
        %v950 = vsel %vm920, %v934, 0.0
        %v951 = vsel %vm920, %v935, 0.0
        %v952 = vsel %vm920, %v936, 0.0
        %v953 = vmul.f32 %v937, %v937
        %v954 = vmul.f32 %v938, %v938
        %v955 = vmul.f32 %v939, %v939
        %v956 = vmul.f32 %v940, %v940
        %v957 = vmul.f32 %v941, %v941
        %v958 = vmul.f32 %v942, %v942
        %v959 = vmul.f32 %v943, %v943
        %v960 = vmul.f32 %v944, %v944
        %v961 = vmul.f32 %v945, %v945
        %v962 = vmul.f32 %v946, %v946
        %v963 = vmul.f32 %v947, %v947
        %v964 = vmul.f32 %v948, %v948
        %v965 = vmul.f32 %v949, %v949
        %v966 = vmul.f32 %v950, %v950
        %v967 = vmul.f32 %v951, %v951
        %v968 = vmul.f32 %v952, %v952
        %969 = vadd.xlane.f32.xlu0 %v953
        %v970 = vpop.xlane.xlu0 %969
        %971 = vadd.xlane.f32.xlu0 %v954
        %v972 = vpop.xlane.xlu0 %971
        %973 = vadd.xlane.f32.xlu0 %v955
        %v974 = vpop.xlane.xlu0 %973
        %975 = vadd.xlane.f32.xlu0 %v956
        %v976 = vpop.xlane.xlu0 %975
        %977 = vadd.xlane.f32.xlu0 %v957
        %v978 = vpop.xlane.xlu0 %977
        %979 = vadd.xlane.f32.xlu0 %v958
        %v980 = vpop.xlane.xlu0 %979
        %981 = vadd.xlane.f32.xlu0 %v959
        %v982 = vpop.xlane.xlu0 %981
        %983 = vadd.xlane.f32.xlu0 %v960
        %v984 = vpop.xlane.xlu0 %983
        %985 = vadd.xlane.f32.xlu0 %v961
        %v986 = vpop.xlane.xlu0 %985
        %987 = vadd.xlane.f32.xlu0 %v962
        %v988 = vpop.xlane.xlu0 %987
        %989 = vadd.xlane.f32.xlu0 %v963
        %v990 = vpop.xlane.xlu0 %989
        %991 = vadd.xlane.f32.xlu0 %v964
        %v992 = vpop.xlane.xlu0 %991
        %993 = vadd.xlane.f32.xlu0 %v965
        %v994 = vpop.xlane.xlu0 %993
        %995 = vadd.xlane.f32.xlu0 %v966
        %v996 = vpop.xlane.xlu0 %995
        %997 = vadd.xlane.f32.xlu0 %v967
        %v998 = vpop.xlane.xlu0 %997
        %999 = vadd.xlane.f32.xlu0 %v968
        %v1000 = vpop.xlane.xlu0 %999
        %v1001 = vmul.f32 %v970, 0.0078125
        %v1002 = vmul.f32 %v972, 0.0078125
        %v1003 = vmul.f32 %v974, 0.0078125
        %v1004 = vmul.f32 %v976, 0.0078125
        %v1005 = vmul.f32 %v978, 0.0078125
        %v1006 = vmul.f32 %v980, 0.0078125
        %v1007 = vmul.f32 %v982, 0.0078125
        %v1008 = vmul.f32 %v984, 0.0078125
        %v1009 = vmul.f32 %v986, 0.0078125
        %v1010 = vmul.f32 %v988, 0.0078125
        %v1011 = vmul.f32 %v990, 0.0078125
        %v1012 = vmul.f32 %v992, 0.0078125
        %v1013 = vmul.f32 %v994, 0.0078125
        %v1014 = vmul.f32 %v996, 0.0078125
        %v1015 = vmul.f32 %v998, 0.0078125
        %v1016 = vmul.f32 %v1000, 0.0078125
        %v1017 = vadd.f32 %v1001, 1e-05
        %v1018 = vadd.f32 %v1002, 1e-05
        %v1019 = vadd.f32 %v1003, 1e-05
        %v1020 = vadd.f32 %v1004, 1e-05
        %v1021 = vadd.f32 %v1005, 1e-05
        %v1022 = vadd.f32 %v1006, 1e-05
        %v1023 = vadd.f32 %v1007, 1e-05
        %v1024 = vadd.f32 %v1008, 1e-05
        %v1025 = vadd.f32 %v1009, 1e-05
        %v1026 = vadd.f32 %v1010, 1e-05
        %v1027 = vadd.f32 %v1011, 1e-05
        %v1028 = vadd.f32 %v1012, 1e-05
        %v1029 = vadd.f32 %v1013, 1e-05
        %v1030 = vadd.f32 %v1014, 1e-05
        %v1031 = vadd.f32 %v1015, 1e-05
        %v1032 = vadd.f32 %v1016, 1e-05
        %v1033 = vrsqrt.pop %v1017
        %v1034 = vrsqrt.pop %v1018
        %v1035 = vrsqrt.pop %v1019
        %v1036 = vrsqrt.pop %v1020
        %v1037 = vrsqrt.pop %v1021
        %v1038 = vrsqrt.pop %v1022
        %v1039 = vrsqrt.pop %v1023
        %v1040 = vrsqrt.pop %v1024
        %v1041 = vrsqrt.pop %v1025
        %v1042 = vrsqrt.pop %v1026
        %v1043 = vrsqrt.pop %v1027
        %v1044 = vrsqrt.pop %v1028
        %v1045 = vrsqrt.pop %v1029
        %v1046 = vrsqrt.pop %v1030
        %v1047 = vrsqrt.pop %v1031
        %v1048 = vrsqrt.pop %v1032
        %v1049 = vmul.f32 %v937, %v1033
        %v1050 = vmul.f32 %v938, %v1034
        %v1051 = vmul.f32 %v939, %v1035
        %v1052 = vmul.f32 %v940, %v1036
        %v1053 = vmul.f32 %v941, %v1037
        %v1054 = vmul.f32 %v942, %v1038
        %v1055 = vmul.f32 %v943, %v1039
        %v1056 = vmul.f32 %v944, %v1040
        %v1057 = vmul.f32 %v945, %v1041
        %v1058 = vmul.f32 %v946, %v1042
        %v1059 = vmul.f32 %v947, %v1043
        %v1060 = vmul.f32 %v948, %v1044
        %v1061 = vmul.f32 %v949, %v1045
        %v1062 = vmul.f32 %v950, %v1046
        %v1063 = vmul.f32 %v951, %v1047
        %v1064 = vmul.f32 %v952, %v1048
        %v1065 = vld [vmem:[%s5] sm:$0x1]
        %v1067 = vlaneseq
        %v1068 = vshrl.u32 %v1067, 7
        %v1069 = vsub.s32 0, %v1068
        %v1070 = vrot.slane %v1065, %v1069
        %v1072 = vmul.f32 %v1049, %v1070
        %v1073 = vmul.f32 %v1050, %v1070
        %v1074 = vmul.f32 %v1051, %v1070
        %v1075 = vmul.f32 %v1052, %v1070
        %v1076 = vmul.f32 %v1053, %v1070
        %v1077 = vmul.f32 %v1054, %v1070
        %v1078 = vmul.f32 %v1055, %v1070
        %v1079 = vmul.f32 %v1056, %v1070
        %v1080 = vmul.f32 %v1057, %v1070
        %v1081 = vmul.f32 %v1058, %v1070
        %v1082 = vmul.f32 %v1059, %v1070
        %v1083 = vmul.f32 %v1060, %v1070
        %v1084 = vmul.f32 %v1061, %v1070
        %v1085 = vmul.f32 %v1062, %v1070
        %v1086 = vmul.f32 %v1063, %v1070
        %v1087 = vmul.f32 %v1064, %v1070
        %v1088 = vld [vmem:[%s6] sm:$0x1]
        %v1090 = vlaneseq
        %v1091 = vshrl.u32 %v1090, 7
        %v1092 = vsub.s32 0, %v1091
        %v1093 = vrot.slane %v1088, %v1092
        %v1095 = vadd.f32 %v1072, %v1093
        %v1096 = vadd.f32 %v1073, %v1093
        %v1097 = vadd.f32 %v1074, %v1093
        %v1098 = vadd.f32 %v1075, %v1093
        %v1099 = vadd.f32 %v1076, %v1093
        %v1100 = vadd.f32 %v1077, %v1093
        %v1101 = vadd.f32 %v1078, %v1093
        %v1102 = vadd.f32 %v1079, %v1093
        %v1103 = vadd.f32 %v1080, %v1093
        %v1104 = vadd.f32 %v1081, %v1093
        %v1105 = vadd.f32 %v1082, %v1093
        %v1106 = vadd.f32 %v1083, %v1093
        %v1107 = vadd.f32 %v1084, %v1093
        %v1108 = vadd.f32 %v1085, %v1093
        %v1109 = vadd.f32 %v1086, %v1093
        %v1110 = vadd.f32 %v1087, %v1093
        %1111 = vst [vmem:[%s325] sm:$0xff] %v1095
        %1112 = vst [vmem:[%s325 + $0x8] sm:$0xff] %v1096
        %1113 = vst [vmem:[%s325 + $0x10] sm:$0xff] %v1097
        %1114 = vst [vmem:[%s325 + $0x18] sm:$0xff] %v1098
        %1115 = vst [vmem:[%s325 + $0x20] sm:$0xff] %v1099
        %1116 = vst [vmem:[%s325 + $0x28] sm:$0xff] %v1100
        %1117 = vst [vmem:[%s325 + $0x30] sm:$0xff] %v1101
        %1118 = vst [vmem:[%s325 + $0x38] sm:$0xff] %v1102
        %1119 = vst [vmem:[%s325 + $0x40] sm:$0xff] %v1103
        %1120 = vst [vmem:[%s325 + $0x48] sm:$0xff] %v1104
        %1121 = vst [vmem:[%s325 + $0x50] sm:$0xff] %v1105
        %1122 = vst [vmem:[%s325 + $0x58] sm:$0xff] %v1106
        %1123 = vst [vmem:[%s325 + $0x60] sm:$0xff] %v1107
        %1124 = vst [vmem:[%s325 + $0x68] sm:$0xff] %v1108
        %1125 = vst [vmem:[%s325 + $0x70] sm:$0xff] %v1109
        %1126 = vst [vmem:[%s325 + $0x78] sm:$0xff] %v1110
        %s1127 = sand.u32 %s185, 1
        %s1128 = scalar_lea.sflag [#allocation4], %s1127
        %s1129 = sand.u32 %s185, 1
        %s1130 = smul.addr %s1129, 128
        %s1131 = scalar_lea.vmem [#allocation8], %s1130
        // Predicated region
        $region61: #{tpu_custom_call.1} parent=47 // pred_check
          %p1132 = pneg %p195
        $region62: #{tpu_custom_call.1} parent=47 // pred_check_branch
          %1134 = sbr.rel (%p1132) target = $region64
        $region63: #{tpu_custom_call.1} parent=47 // pred_region
          %s1135 = smul.u32 16, %s25
          %s1137 = ssub.s32 2048, 2048
          %1138 = vsyncadd %s1128, %s1137
          %s1139 = smul.addr %s1135, 128
          %s1140 = scalar_lea.hbm %s7, %s1139
          %s1141 = sshll.u32 %s1131, 4
          %s1142 = int_to_ptr.vmem [resolvable:$true] %s1141
          %1147 = dma.vmem_to_hbm [thread:$0]  %s1142, 2048, %s1140, %s1128, 128, 128, 8
        $region64: #{tpu_custom_call.1} parent=47 // pred_fallthru
          _
      $region48: #{tpu_custom_call.1} parent=5 // pred_fallthru
        _
      %p1148 = scmp.le.s32.totalorder 2, %s20
      // Predicated region
      $region65: #{tpu_custom_call.1} parent=5 // pred_check
        %p1149 = pneg %p1148
      $region66: #{tpu_custom_call.1} parent=5 // pred_check_branch
        %1151 = sbr.rel (%p1149) target = $region68
      $region67: #{tpu_custom_call.1} parent=5 // pred_region
        %s1152 = ssub.s32 %s20, 2
        // Predicated region
        $region69: #{tpu_custom_call.1} parent=67 // pred_check
          %p1153 = pneg %p201
        $region70: #{tpu_custom_call.1} parent=67 // pred_check_branch
          %1155 = sbr.rel (%p1153) target = $region72
        $region71: #{tpu_custom_call.1} parent=67 // pred_region
          %s1156 = sand.u32 %s186, 1
          %s1157 = scalar_lea.sflag [#allocation4], %s1156
          %s1158 = sand.u32 %s186, 1
          %s1159 = smul.addr %s1158, 128
          %s1160 = scalar_lea.vmem [#allocation8], %s1159
          %1161 = dma.done %s1157, 2048
        $region72: #{tpu_custom_call.1} parent=67 // pred_fallthru
          _
      $region68: #{tpu_custom_call.1} parent=5 // pred_fallthru
        _
    $region6: #{tpu_custom_call.1} parent=1 // loop_footer
      %s24 = sadd.s32 1, %s20
    $region7: #{tpu_custom_call.1} parent=1 // loop_footer_branch
      %19 = sbr.rel target = $region3
    $region8: #{tpu_custom_call.1} parent=1 // loop_exit
      _
    %1162 = vsyncpa [#allocation3], 1
    %s1163 = scalar_lea.sflag [#allocation3], 1
    %1164 = vsyncpa %s1163, 1
    %1165 = vsyncpa [#allocation6], 1
    %1166 = vsyncpa [#allocation4], 1
    %s1167 = scalar_lea.sflag [#allocation4], 1
    %1168 = vsyncpa %s1167, 1

</llo_original>
